<compile_context>
chip_gen: v7x
topology: tpu7x:2x2x1
jax: 0.10.0
libtpu: 0.0.40
codegen_flags: <defaults>
</compile_context>

<pallas_src>
import jax
import jax.numpy as jnp
from jax import lax
from jax.experimental import pallas as pl
from jax.experimental.pallas import tpu as pltpu


def _cdiv(a, b):
    return -(-a // b)


def _round_up(x, m):
    return _cdiv(x, m) * m


def _vmem_capacity_bytes():
    """Physical VMEM per TensorCore; fall back to the v7x floor (64 MiB)."""
    try:
        return int(pltpu.get_tpu_info().vmem_capacity_bytes)
    except Exception:
        return 64 * 1024 * 1024


# ----------------------------------------------------------------------------
# Pallas kernel: fused crop-resize(+flip) warp of a block of channels.
#   out[c] = Ry @ img[c] @ Rx^T  for c_blk channels of one batch element.
# Per-channel matmuls keep the tmp live range to a single (Hp, Wp) tile.
# ----------------------------------------------------------------------------
def _warp_block_kernel(ry_ref, rxt_ref, img_ref, out_ref):
    ry = ry_ref[...]            # (Hp, Hp)  bf16
    rxt = rxt_ref[...]          # (Wp, Wp)  bf16 (Rx pre-transposed in wrapper)
    c_blk = img_ref.shape[0]

    def body(c, carry):
        img_c = img_ref[c]                                   # (Hp, Wp) bf16
        # Column warp: (Hp, Wp) @ (Wp, Wp)
        tmp = jnp.dot(img_c, rxt,
                      preferred_element_type=jnp.float32).astype(jnp.bfloat16)
        # Row warp: (Hp, Hp) @ (Hp, Wp) -> bf16 store (halves HBM writeback)
        out_ref[c] = jnp.dot(ry, tmp,
                             preferred_element_type=jnp.float32
                             ).astype(out_ref.dtype)
        return carry

    # fori_loop bounds per-channel live ranges; unroll only tiny trip counts.
    lax.fori_loop(0, c_blk, body, 0, unroll=(c_blk <= 8))


def warp_all_pallas(imgs, ry, rxt, c_blk, vmem_limit_bytes):
    """imgs: (N, C_pad, Hp, Wp) bf16; ry: (N, Hp, Hp) bf16; rxt: (N, Wp, Wp) bf16."""
    n, c_pad, hp, wp = imgs.shape
    n_cb = c_pad // c_blk
    return pl.pallas_call(
        _warp_block_kernel,
        out_shape=jax.ShapeDtypeStruct((n, c_pad, hp, wp), jnp.bfloat16),
        # Channel-block axis innermost: Ry/Rx^T index_maps depend only on b,
        # so the warp matrices stay VMEM-resident across channel blocks.
        grid=(n, n_cb),
        in_specs=[
            pl.BlockSpec((None, hp, hp), lambda b, cb: (b, 0, 0)),           # Ry
            pl.BlockSpec((None, wp, wp), lambda b, cb: (b, 0, 0)),           # Rx^T
            pl.BlockSpec((None, c_blk, hp, wp), lambda b, cb: (b, cb, 0, 0)),
        ],
        out_specs=pl.BlockSpec((None, c_blk, hp, wp), lambda b, cb: (b, cb, 0, 0)),
        compiler_params=pltpu.CompilerParams(
            dimension_semantics=("parallel", "parallel"),
            vmem_limit_bytes=vmem_limit_bytes),
    )(ry, rxt, imgs)


# ----------------------------------------------------------------------------
# Plain-JAX glue: param sampling + interpolation-matrix construction.
# ----------------------------------------------------------------------------
def _interp_matrix(start, end, size_out, size_in):
    """Bilinear (align_corners=True) interpolation matrix for one axis."""
    denom = jnp.float32(max(size_out - 1, 1))
    y = jnp.arange(size_out, dtype=jnp.float32)
    src = start + y * (end - start) / denom
    src = jnp.clip(src, 0.0, jnp.float32(size_in - 1))
    i0f = jnp.floor(src)
    frac = src - i0f
    i0 = i0f.astype(jnp.int32)
    i1 = jnp.minimum(i0 + 1, size_in - 1)
    rows = jnp.arange(size_out)
    m = jnp.zeros((size_out, size_in), jnp.float32)
    m = m.at[rows, i0].add(1.0 - frac)
    m = m.at[rows, i1].add(frac)
    return m


def _sample_warp_matrices(key, n, h, w):
    """Per-batch RandomResizedCrop + RandomHorizontalFlip params -> (Ry, Rx^T)."""
    k_scale, k_ratio, k_x, k_y, k_flip = jax.random.split(key, 5)
    scale = jax.random.uniform(k_scale, (n,), minval=0.8, maxval=1.0)
    log_r = jax.random.uniform(k_ratio, (n,),
                               minval=jnp.log(1.9), maxval=jnp.log(2.1))
    ratio = jnp.exp(log_r)                                   # log-uniform ratio
    area = scale * h * w
    crop_w = jnp.minimum(jnp.sqrt(area * ratio), jnp.float32(w))
    crop_h = jnp.minimum(jnp.sqrt(area / ratio), jnp.float32(h))
    x0 = jax.random.uniform(k_x, (n,)) * (w - crop_w)
    y0 = jax.random.uniform(k_y, (n,)) * (h - crop_h)
    x1 = x0 + crop_w - 1.0
    y1 = y0 + crop_h - 1.0
    flip = jax.random.bernoulli(k_flip, 0.5, (n,))

    ry = jax.vmap(lambda a, b: _interp_matrix(a, b, h, h))(y0, y1)   # (N,H,H)
    rx = jax.vmap(lambda a, b: _interp_matrix(a, b, w, w))(x0, x1)   # (N,W,W)
    # Horizontal flip: out[:, x] <- out[:, W-1-x]  ==  reverse Rx output rows.
    rx = jnp.where(flip[:, None, None], rx[:, ::-1, :], rx)
    rxt = jnp.swapaxes(rx, -1, -2)                           # pre-transpose once
    return ry, rxt


def mask_augmentation_forward(data_dict, key):
    """JAX/Pallas equivalent of MaskAugmentation.forward (pure, returns new dict)."""
    out = dict(data_dict)
    n, _, h, w = data_dict["mvobj_mask"].shape

    # ---- gather everything that gets warped into one channel-concat slab ----
    pieces, tensors = [], []

    def _add(name, t, idx=None):
        pieces.append((name, idx, t.shape[1]))
        tensors.append(t.astype(jnp.bfloat16))   # cast BEFORE concat/pad

    _add("keyframe", data_dict["keyframe"])
    for i, f in enumerate(data_dict["frames"]):
        _add("frames", f, i)
    if "stereo_frame" in data_dict:
        _add("stereo_frame", data_dict["stereo_frame"])
    _add("mvobj_mask", data_dict["mvobj_mask"])
    if "cost_volume" in data_dict:
        _add("cost_volume", data_dict["cost_volume"])
        for i, cv in enumerate(data_dict["single_frame_cvs"]):
            _add("single_frame_cvs", cv, i)

    big = jnp.concatenate(tensors, axis=1)
    c_total = big.shape[1]

    # ---- pad spatial dims to TPU-friendly multiples (lane-dense stores) ----
    # NOTE: sized for real monorec inputs (256x512) where this padding is zero;
    # toy W<128 inputs pay extra lane padding in the column warp.
    hp = _round_up(h, 16)
    wp = _round_up(w, 128)

    # ---- channel blocking sized from a generation-aware VMEM budget ----
    vmem_cap = _vmem_capacity_bytes()
    vmem_limit = int(vmem_cap * 0.75)
    budget = int(vmem_cap * 0.50)
    # Double-buffered bf16 input + bf16 output blocks per channel:
    per_chan = hp * wp * 2 * 2 * 2
    # Fixed: double-buffered Ry/Rx^T (bf16) + in-kernel per-channel tmp
    # (bf16 tmp + two f32 MXU result tiles, single-buffered).
    fixed = 2 * (hp * hp + wp * wp) * 2 + hp * wp * (2 + 4 + 4)
    c_blk_max = max(1, (budget - fixed) // per_chan)
    c_blk_max = int(min(c_blk_max, c_total))
    # Balance blocks to minimize zero-channel padding.
    n_cb = _cdiv(c_total, c_blk_max)
    # Megacore: make sure the grid has >=2 shards for the 2 TCs on v7x.
    if n * n_cb < 2 and c_total >= 2:
        n_cb = 2
    c_blk = _cdiv(c_total, n_cb)
    c_pad = n_cb * c_blk

    big = jnp.pad(big, ((0, 0), (0, c_pad - c_total), (0, hp - h), (0, wp - w)))

    ry, rxt = _sample_warp_matrices(key, n, h, w)
    ry = jnp.pad(ry, ((0, 0), (0, hp - h), (0, hp - h))).astype(jnp.bfloat16)
    rxt = jnp.pad(rxt, ((0, 0), (0, wp - w), (0, wp - w))).astype(jnp.bfloat16)

    # ---- single fused kernel call (bf16 out -> half the HBM writeback) ----
    warped = warp_all_pallas(big, ry, rxt, c_blk, vmem_limit)[:, :c_total, :h, :w]

    # ---- split channels back into the dict entries (upcast to f32 here) ----
    frames_out = list(data_dict.get("frames", []))
    sfcv_out = list(data_dict.get("single_frame_cvs", []))
    off = 0
    for name, idx, c in pieces:
        chunk = warped[:, off:off + c]
        off += c
        if name == "frames":
            frames_out[idx] = chunk.astype(jnp.float32)
        elif name == "single_frame_cvs":
            sfcv_out[idx] = chunk.astype(jnp.float32)
        elif name == "mvobj_mask":
            out["mvobj_mask"] = (chunk > 0.5).astype(jnp.float32)
        else:
            out[name] = chunk.astype(jnp.float32)
    if "frames" in data_dict:
        out["frames"] = frames_out
    if "single_frame_cvs" in data_dict:
        out["single_frame_cvs"] = sfcv_out
    out["target"] = out["mvobj_mask"]
    return out


# ----------------------------------------------------------------------------
if __name__ == "__main__":
    key = jax.random.PRNGKey(0)
    N, H, W = 2, 16, 32          # small spatial shapes, ratio ~2 like (256,512)
    C_img, C_cv = 3, 4

    ks = jax.random.split(key, 10)
    data_dict = {
        "keyframe": jax.random.normal(ks[0], (N, C_img, H, W), jnp.float32),
        "frames": [
            jax.random.normal(ks[1], (N, C_img, H, W), jnp.float32),
            jax.random.normal(ks[2], (N, C_img, H, W), jnp.float32),
        ],
        "stereo_frame": jax.random.normal(ks[3], (N, C_img, H, W), jnp.float32),
        "mvobj_mask": jax.random.uniform(ks[4], (N, 1, H, W), jnp.float32),
        "cost_volume": jax.random.normal(ks[5], (N, C_cv, H, W), jnp.float32),
        "single_frame_cvs": [
            jax.random.normal(ks[6], (N, C_cv, H, W), jnp.float32),
            jax.random.normal(ks[7], (N, C_cv, H, W), jnp.float32),
        ],
    }

    result = mask_augmentation_forward(data_dict, ks[8])
    jax.block_until_ready(result["target"])
    jax.block_until_ready(result["keyframe"])
    jax.block_until_ready(result["cost_volume"])

    # sanity: mask must be strictly binary after thresholding
    mask = result["mvobj_mask"]
    assert mask.shape == (N, 1, H, W)
    assert bool(jnp.all((mask == 0.0) | (mask == 1.0)))
    assert result["keyframe"].shape == (N, C_img, H, W)
    assert result["keyframe"].dtype == jnp.float32
    assert bool(jnp.all(jnp.isfinite(result["keyframe"])))
    assert result["cost_volume"].shape == (N, C_cv, H, W)
    assert bool(jnp.all(jnp.isfinite(result["cost_volume"])))
    assert result["frames"][0].shape == (N, C_img, H, W)
    assert bool(jnp.all(jnp.isfinite(result["frames"][0])))

    print("KERNEL_OK")
</pallas_src>

<mosaic_0001>
module attributes {stable_mosaic.version = 11 : i64} {
  func.func @_warp_block_kernel(%arg0: i32, %arg1: i32, %arg2: memref<1x16x16xbf16, #tpu.memory_space<vmem>>, %arg3: memref<1x128x128xbf16, #tpu.memory_space<vmem>>, %arg4: memref<1x25x16x128xbf16, #tpu.memory_space<vmem>>, %arg5: memref<1x25x16x128xbf16, #tpu.memory_space<vmem>>) attributes {dimension_semantics = [#tpu.dimension_semantics<parallel>, #tpu.dimension_semantics<parallel>], iteration_bounds = array<i64: 2, 1>, scalar_prefetch = 0 : i64, scratch_operands = 0 : i64, tpu.core_type = #tpu.core_type<tc>, window_params = [{transform_indices = @transform_0, window_bounds = array<i64: 1, 16, 16>}, {transform_indices = @transform_1, window_bounds = array<i64: 1, 128, 128>}, {transform_indices = @transform_2, window_bounds = array<i64: 1, 25, 16, 128>}, {transform_indices = @transform_3, window_bounds = array<i64: 1, 25, 16, 128>}]} {
    %c0 = arith.constant 0 : index
    %c0_0 = arith.constant 0 : index
    %c0_1 = arith.constant 0 : index
    %0 = vector.load %arg2[%c0, %c0_0, %c0_1] : memref<1x16x16xbf16, #tpu.memory_space<vmem>>, vector<1x16x16xbf16>
    %1 = vector.shape_cast %0 : vector<1x16x16xbf16> to vector<16x16xbf16>
    %c0_2 = arith.constant 0 : index
    %c0_3 = arith.constant 0 : index
    %c0_4 = arith.constant 0 : index
    %2 = vector.load %arg3[%c0_2, %c0_3, %c0_4] : memref<1x128x128xbf16, #tpu.memory_space<vmem>>, vector<1x128x128xbf16>
    %3 = vector.shape_cast %2 : vector<1x128x128xbf16> to vector<128x128xbf16>
    %c0_i32 = arith.constant 0 : i32
    %c25_i32 = arith.constant 25 : i32
    %4 = arith.addi %c0_i32, %c25_i32 : i32
    %c1_i32 = arith.constant 1 : i32
    scf.for %arg6 = %c0_i32 to %4 step %c1_i32  : i32 {
      %c0_6 = arith.constant 0 : index
      %5 = arith.index_cast %arg6 : i32 to index
      %c0_7 = arith.constant 0 : index
      %c0_8 = arith.constant 0 : index
      %6 = vector.load %arg4[%c0_6, %5, %c0_7, %c0_8] : memref<1x25x16x128xbf16, #tpu.memory_space<vmem>>, vector<1x1x16x128xbf16>
      %7 = vector.shape_cast %6 : vector<1x1x16x128xbf16> to vector<16x128xbf16>
      %cst = arith.constant dense<0.000000e+00> : vector<16x128xf32>
      %8 = tpu.matmul %7, %3, %cst {dimension_numbers = #tpu.dot_dimension_numbers<[1], [0], [0], [1], [0, 0, 1, 1], [], []>} : vector<16x128xbf16>, vector<128x128xbf16>, vector<16x128xf32> -> vector<16x128xf32>
      %9 = arith.truncf %8 : vector<16x128xf32> to vector<16x128xbf16>
      %cst_9 = arith.constant dense<0.000000e+00> : vector<16x128xf32>
      %10 = tpu.matmul %1, %9, %cst_9 {dimension_numbers = #tpu.dot_dimension_numbers<[1], [0], [0], [1], [0, 0, 1, 1], [], []>} : vector<16x16xbf16>, vector<16x128xbf16>, vector<16x128xf32> -> vector<16x128xf32>
      %11 = arith.truncf %10 : vector<16x128xf32> to vector<16x128xbf16>
      %c0_10 = arith.constant 0 : index
      %12 = arith.index_cast %arg6 : i32 to index
      %c0_11 = arith.constant 0 : index
      %c0_12 = arith.constant 0 : index
      %13 = vector.load %arg5[%c0_10, %12, %c0_11, %c0_12] : memref<1x25x16x128xbf16, #tpu.memory_space<vmem>>, vector<1x1x16x128xbf16>
      %14 = vector.shape_cast %13 : vector<1x1x16x128xbf16> to vector<16x128xbf16>
      %15 = vector.shape_cast %11 : vector<16x128xbf16> to vector<1x1x16x128xbf16>
      tpu.vector_store %arg5[%c0_10, %12, %c0_11, %c0_12], %15 {strides = array<i32>} : memref<1x25x16x128xbf16, #tpu.memory_space<vmem>>, vector<1x1x16x128xbf16>,
    }
    %c25_i32_5 = arith.constant 25 : i32
    return
  }
  func.func @transform_0(%arg0: i32, %arg1: i32) -> (i32, i32, i32) {
    %c0_i32 = arith.constant 0 : i32
    %c0_i32_0 = arith.constant 0 : i32
    %c0_i32_1 = arith.constant 0 : i32
    return %arg0, %c0_i32, %c0_i32_0 : i32, i32, i32
  }
  func.func @transform_1(%arg0: i32, %arg1: i32) -> (i32, i32, i32) {
    %c0_i32 = arith.constant 0 : i32
    %c0_i32_0 = arith.constant 0 : i32
    %c0_i32_1 = arith.constant 0 : i32
    return %arg0, %c0_i32, %c0_i32_0 : i32, i32, i32
  }
  func.func @transform_2(%arg0: i32, %arg1: i32) -> (i32, i32, i32, i32) {
    %c0_i32 = arith.constant 0 : i32
    %c0_i32_0 = arith.constant 0 : i32
    %c0_i32_1 = arith.constant 0 : i32
    return %arg0, %arg1, %c0_i32, %c0_i32_0 : i32, i32, i32, i32
  }
  func.func @transform_3(%arg0: i32, %arg1: i32) -> (i32, i32, i32, i32) {
    %c0_i32 = arith.constant 0 : i32
    %c0_i32_0 = arith.constant 0 : i32
    %c0_i32_1 = arith.constant 0 : i32
    return %arg0, %arg1, %c0_i32, %c0_i32_0 : i32, i32, i32, i32
  }
}

</mosaic_0001>

<llo_original>
// kernel: tpu_custom_call.1
$region0: #{tpu_custom_call.1}
  #allocation0 [shape = 'u32[]', space=smem, size = 0x4, offset = 0x4, fixed_abs, tag = 'smem constant byte address 0x4 - core index']
  #allocation1 [shape = 'u32[144,128]{1,0:T(1,128)}', space=vmem, size = 0x12000, scoped, tag = 'internal scratch']
  %s0 = inlined_call_operand.hbm [shape: bf16[2,16,16], index: 0, kind: input, shape index: {}]
  %s1 = inlined_call_operand.hbm [shape: bf16[2,128,128], index: 1, kind: input, shape index: {}]
  %s2 = inlined_call_operand.hbm [shape: bf16[2,25,16,128], index: 2, kind: input, shape index: {}]
  %s3 = inlined_call_operand.hbm [shape: bf16[2,25,16,128], index: 3, kind: output, shape index: {}]
  %s4 = sld [smem:[#allocation0]]
  $region64: #{tpu_custom_call.1} parent=0
    _
  %s6 = ssub.s32 1, %s4
  %s7 = scalar_select 0, %s6, %s4
  $region1: #{tpu_custom_call.1} parent=0
    #allocation2 [shape = 'u8[8192]{0}', space=vmem, size = 0x2000, scoped, tag = 'input window, operand 0']
    #allocation3 [shape = 's32[2]{0}', space=sflag, size = 0x8, scoped, tag = 'scoped memory for tpu_custom_call.1']
    #allocation4 [shape = 's32[2]{0}', space=sflag, size = 0x8, scoped, tag = 'scoped memory for tpu_custom_call.1']
    #allocation5 [shape = 'u8[65536]{0}', space=vmem, size = 0x10000, scoped, tag = 'input window, operand 1']
    #allocation6 [shape = 's32[2]{0}', space=sflag, size = 0x8, scoped, tag = 'scoped memory for tpu_custom_call.1']
    #allocation7 [shape = 'u8[204800]{0}', space=vmem, size = 0x32000, scoped, tag = 'input window, operand 2']
    #allocation8 [shape = 'u8[204800]{0}', space=vmem, size = 0x32000, scoped, tag = 'output window, operand 0']
    %8 = vsyncpa [#allocation3], 0
    %s9 = scalar_lea.sflag [#allocation3], 1
    %10 = vsyncpa %s9, 0
    %11 = vsyncpa [#allocation6], 0
    %s12 = scalar_lea.sflag [#allocation6], 1
    %13 = vsyncpa %s12, 0
    %14 = vsyncpa [#allocation4], 0
    %s15 = scalar_lea.sflag [#allocation4], 1
    %16 = vsyncpa %s15, 0
    loop: start=0, step=1, limit=4
    $region2: #{tpu_custom_call.1} parent=1 // loop_pre_header
      _
    $region3: #{tpu_custom_call.1} parent=1 // loop_header
      %s18 = sphi 0, %s22
      %p19 = scmp.ge.s32.totalorder %s18, 4
      %s25 = sphi 0, %s37
      %s26 = sphi 0, %s33
      %s27 = sphi 0, %s25
      %s28 = sphi 0, %s26
      %s29 = sphi 0, %s27
      %s30 = sphi 0, %s28
      %s40 = sphi 0, %s42
      %s43 = sphi 0, %s40
      %s44 = sphi 0, %s43
      %s60 = sphi 0, %s44
      %s66 = sphi 0, %s68
      %s69 = sphi 0, %s66
      %s70 = sphi 0, %s69
      %s86 = sphi 0, %s70
      %s94 = sphi 0, %s96
      %s97 = sphi 0, %s94
      %s98 = sphi 0, %s97
      %s114 = sphi 0, %s98
      %s122 = sphi 0, %s124
      %s125 = sphi 0, %s122
      %s126 = sphi 0, %s125
      %s142 = sphi 0, %s126
    $region4: #{tpu_custom_call.1} parent=1 // loop_header_branch
      %21 = sbr.rel (%p19) target = $region8
    $region5: #{tpu_custom_call.1} parent=1 // loop_body
      %s23 = ssub.s32 %s18, 1
      %s24 = ssub.s32 %s18, 2
      %s31 = sadd.s32 1, %s26
      %p32 = scmp.ge.s32.totalorder %s31, 1
      %s33 = scalar_select %p32, 0, %s31
      %s34 = sadd.s32 1, %s25
      %s35 = scalar_select %p32, %s34, %s25
      %p36 = scmp.ge.s32.totalorder %s35, 2
      %s37 = scalar_select %p36, 0, %s35
      %s38 = ssub.s32 %s25, %s37
      %p39 = scmp.eq.s32.totalorder %s38, 0
      %s41 = sadd.s32 %s40, 1
      %s42 = scalar_select %p39, %s40, %s41
      %p45 = pneg %p39
      %p46 = scmp.eq.s32.totalorder %s18, 1
      %p47 = por %p45, %p46
      %p48 = scmp.ne.s32.totalorder %s40, %s43
      %p49 = scmp.eq.s32.totalorder %s18, 0
      %p50 = por %p48, %p49
      %p51 = scmp.ne.s32.totalorder %s40, %s43
      %p52 = scmp.eq.s32.totalorder %s23, 1
      %p53 = por %p51, %p52
      %p54 = scmp.ne.s32.totalorder %s43, %s44
      %p55 = scmp.eq.s32.totalorder %s23, 0
      %p56 = por %p54, %p55
      %p57 = scmp.ne.s32.totalorder %s43, %s44
      %p58 = scmp.eq.s32.totalorder %s24, 1
      %p59 = por %p57, %p58
      %p61 = scmp.ne.s32.totalorder %s44, %s60
      %p62 = scmp.eq.s32.totalorder %s24, 0
      %p63 = por %p61, %p62
      %s64 = ssub.s32 %s25, %s37
      %p65 = scmp.eq.s32.totalorder %s64, 0
      %s67 = sadd.s32 %s66, 1
      %s68 = scalar_select %p65, %s66, %s67
      %p71 = pneg %p65
      %p72 = scmp.eq.s32.totalorder %s18, 1
      %p73 = por %p71, %p72
      %p74 = scmp.ne.s32.totalorder %s66, %s69
      %p75 = scmp.eq.s32.totalorder %s18, 0
      %p76 = por %p74, %p75
      %p77 = scmp.ne.s32.totalorder %s66, %s69
      %p78 = scmp.eq.s32.totalorder %s23, 1
      %p79 = por %p77, %p78
      %p80 = scmp.ne.s32.totalorder %s69, %s70
      %p81 = scmp.eq.s32.totalorder %s23, 0
      %p82 = por %p80, %p81
      %p83 = scmp.ne.s32.totalorder %s69, %s70
      %p84 = scmp.eq.s32.totalorder %s24, 1
      %p85 = por %p83, %p84
      %p87 = scmp.ne.s32.totalorder %s70, %s86
      %p88 = scmp.eq.s32.totalorder %s24, 0
      %p89 = por %p87, %p88
      %s90 = ssub.s32 %s25, %s37
      %s91 = ssub.s32 %s26, %s33
      %s92 = sor.u32 %s90, %s91
      %p93 = scmp.eq.s32.totalorder %s92, 0
      %s95 = sadd.s32 %s94, 1
      %s96 = scalar_select %p93, %s94, %s95
      %p99 = pneg %p93
      %p100 = scmp.eq.s32.totalorder %s18, 1
      %p101 = por %p99, %p100
      %p102 = scmp.ne.s32.totalorder %s94, %s97
      %p103 = scmp.eq.s32.totalorder %s18, 0
      %p104 = por %p102, %p103
      %p105 = scmp.ne.s32.totalorder %s94, %s97
      %p106 = scmp.eq.s32.totalorder %s23, 1
      %p107 = por %p105, %p106
      %p108 = scmp.ne.s32.totalorder %s97, %s98
      %p109 = scmp.eq.s32.totalorder %s23, 0
      %p110 = por %p108, %p109
      %p111 = scmp.ne.s32.totalorder %s97, %s98
      %p112 = scmp.eq.s32.totalorder %s24, 1
      %p113 = por %p111, %p112
      %p115 = scmp.ne.s32.totalorder %s98, %s114
      %p116 = scmp.eq.s32.totalorder %s24, 0
      %p117 = por %p115, %p116
      %s118 = ssub.s32 %s25, %s37
      %s119 = ssub.s32 %s26, %s33
      %s120 = sor.u32 %s118, %s119
      %p121 = scmp.eq.s32.totalorder %s120, 0
      %s123 = sadd.s32 %s122, 1
      %s124 = scalar_select %p121, %s122, %s123
      %p127 = pneg %p121
      %p128 = scmp.eq.s32.totalorder %s18, 1
      %p129 = por %p127, %p128
      %p130 = scmp.ne.s32.totalorder %s122, %s125
      %p131 = scmp.eq.s32.totalorder %s18, 0
      %p132 = por %p130, %p131
      %p133 = scmp.ne.s32.totalorder %s122, %s125
      %p134 = scmp.eq.s32.totalorder %s23, 1
      %p135 = por %p133, %p134
      %p136 = scmp.ne.s32.totalorder %s125, %s126
      %p137 = scmp.eq.s32.totalorder %s23, 0
      %p138 = por %p136, %p137
      %p139 = scmp.ne.s32.totalorder %s125, %s126
      %p140 = scmp.eq.s32.totalorder %s24, 1
      %p141 = por %p139, %p140
      %p143 = scmp.ne.s32.totalorder %s126, %s142
      %p144 = scmp.eq.s32.totalorder %s24, 0
      %p145 = por %p143, %p144
      %p146 = scmp.le.s32.totalorder 1, %s18
      %p147 = scmp.lt.s32.totalorder %s18, 3
      %p148 = pnand %p146, %p147
      %p149 = pneg %p148
      // Predicated region
      $region9: #{tpu_custom_call.1} parent=5 // pred_check
        _
      $region10: #{tpu_custom_call.1} parent=5 // pred_check_branch
        %151 = sbr.rel (%p148) target = $region12
      $region11: #{tpu_custom_call.1} parent=5 // pred_region
        %s152 = ssub.s32 %s18, 1
      $region12: #{tpu_custom_call.1} parent=5 // pred_fallthru
        _
      %p153 = scmp.lt.s32.totalorder %s18, 2
      // Predicated region
      $region13: #{tpu_custom_call.1} parent=5 // pred_check
        %p154 = pneg %p153
      $region14: #{tpu_custom_call.1} parent=5 // pred_check_branch
        %156 = sbr.rel (%p154) target = $region16
      $region15: #{tpu_custom_call.1} parent=5 // pred_region
        // Predicated region
        $region17: #{tpu_custom_call.1} parent=15 // pred_check
          %p157 = pneg %p50
        $region18: #{tpu_custom_call.1} parent=15 // pred_check_branch
          %159 = sbr.rel (%p157) target = $region20
        $region19: #{tpu_custom_call.1} parent=15 // pred_region
          %s160 = sand.u32 %s40, 1
          %s161 = scalar_lea.sflag [#allocation3], %s160
          %s162 = sand.u32 %s40, 1
          %s163 = smul.addr %s162, 8
          %s164 = scalar_lea.vmem [#allocation2], %s163
          %s166 = ssub.s32 128, 128
          %167 = vsyncadd %s161, %s166
          %s168 = smul.addr %s25, 2
          %s169 = smul.addr %s168, 64
          %s170 = scalar_lea.hbm %s0, %s169
          %s171 = sshll.u32 %s164, 4
          %s172 = int_to_ptr.vmem [resolvable:$true] %s171
          %177 = dma.hbm_to_vmem [thread:$0]  %s170, 128, %s172, %s161, 64, 64, 4
        $region20: #{tpu_custom_call.1} parent=15 // pred_fallthru
          _
        // Predicated region
        $region21: #{tpu_custom_call.1} parent=15 // pred_check
          %p178 = pneg %p76
        $region22: #{tpu_custom_call.1} parent=15 // pred_check_branch
          %180 = sbr.rel (%p178) target = $region24
        $region23: #{tpu_custom_call.1} parent=15 // pred_region
          %s181 = sand.u32 %s18, 1
          %s182 = scalar_lea.sflag [#allocation6], %s181
          %s183 = sand.u32 %s66, 1
          %s184 = smul.addr %s183, 64
          %s185 = scalar_lea.vmem [#allocation5], %s184
          %s187 = ssub.s32 1024, 1024
          %188 = vsyncadd %s182, %s187
          %s189 = smul.addr %s25, 16
          %s190 = smul.addr %s189, 64
          %s191 = scalar_lea.hbm %s1, %s190
          %s192 = sshll.u32 %s185, 4
          %s193 = int_to_ptr.vmem [resolvable:$true] %s192
          %198 = dma.hbm_to_vmem [thread:$0]  %s191, 1024, %s193, %s182, 64, 64, 4
        $region24: #{tpu_custom_call.1} parent=15 // pred_fallthru
          _
        // Predicated region
        $region25: #{tpu_custom_call.1} parent=15 // pred_check
          %p199 = pneg %p104
        $region26: #{tpu_custom_call.1} parent=15 // pred_check_branch
          %201 = sbr.rel (%p199) target = $region28
        $region27: #{tpu_custom_call.1} parent=15 // pred_region
          %s202 = sand.u32 %s18, 1
          %s203 = scalar_lea.sflag [#allocation6], %s202
          %s204 = sand.u32 %s94, 1
          %s205 = smul.addr %s204, 200
          %s206 = scalar_lea.vmem [#allocation7], %s205
          %s207 = smul.u32 25, %s26
          %s209 = ssub.s32 3200, 3200
          %210 = vsyncadd %s203, %s209
          %s211 = smul.addr %s207, 2
          %s212 = smul.addr %s25, 50
          %s213 = sadd.s32 %s211, %s212
          %s214 = smul.addr %s213, 64
          %s215 = scalar_lea.hbm %s2, %s214
          %s216 = sshll.u32 %s206, 4
          %s217 = int_to_ptr.vmem [resolvable:$true] %s216
          %222 = dma.hbm_to_vmem [thread:$0]  %s215, 3200, %s217, %s203, 64, 64, 4
        $region28: #{tpu_custom_call.1} parent=15 // pred_fallthru
          _
      $region16: #{tpu_custom_call.1} parent=5 // pred_fallthru
        _
      %p223 = scmp.le.s32.totalorder 1, %s18
      %p224 = scmp.lt.s32.totalorder %s18, 3
      %p225 = pnand %p223, %p224
      %p226 = pneg %p225
      // Predicated region
      $region29: #{tpu_custom_call.1} parent=5 // pred_check
        _
      $region30: #{tpu_custom_call.1} parent=5 // pred_check_branch
        %228 = sbr.rel (%p225) target = $region32
      $region31: #{tpu_custom_call.1} parent=5 // pred_region
        %s229 = ssub.s32 %s18, 1
        %s230 = sand.u32 %s43, 1
        %s231 = scalar_lea.sflag [#allocation3], %s230
        %s232 = sand.u32 %s43, 1
        %s233 = smul.addr %s232, 8
        %s234 = scalar_lea.vmem [#allocation2], %s233
        // Predicated region
        $region33: #{tpu_custom_call.1} parent=31 // pred_check
          %p235 = pneg %p56
        $region34: #{tpu_custom_call.1} parent=31 // pred_check_branch
          %237 = sbr.rel (%p235) target = $region36
        $region35: #{tpu_custom_call.1} parent=31 // pred_region
          %238 = dma.done %s231, 128
        $region36: #{tpu_custom_call.1} parent=31 // pred_fallthru
          _
        %s239 = sand.u32 %s23, 1
        %s240 = scalar_lea.sflag [#allocation6], %s239
        %s241 = sand.u32 %s69, 1
        %s242 = smul.addr %s241, 64
        %s243 = scalar_lea.vmem [#allocation5], %s242
        // Predicated region
        $region37: #{tpu_custom_call.1} parent=31 // pred_check
          %p244 = pneg %p82
        $region38: #{tpu_custom_call.1} parent=31 // pred_check_branch
          %246 = sbr.rel (%p244) target = $region40
        $region39: #{tpu_custom_call.1} parent=31 // pred_region
          %247 = dma.done %s240, 1024
        $region40: #{tpu_custom_call.1} parent=31 // pred_fallthru
          _
        %s248 = sand.u32 %s23, 1
        %s249 = scalar_lea.sflag [#allocation6], %s248
        %s250 = sand.u32 %s97, 1
        %s251 = smul.addr %s250, 200
        %s252 = scalar_lea.vmem [#allocation7], %s251
        // Predicated region
        $region41: #{tpu_custom_call.1} parent=31 // pred_check
          %p253 = pneg %p110
        $region42: #{tpu_custom_call.1} parent=31 // pred_check_branch
          %255 = sbr.rel (%p253) target = $region44
        $region43: #{tpu_custom_call.1} parent=31 // pred_region
          %256 = dma.done %s249, 3200
        $region44: #{tpu_custom_call.1} parent=31 // pred_fallthru
          _
        %s257 = sand.u32 %s43, 1
        %s258 = scalar_lea.sflag [#allocation3], %s257
        %s259 = sand.u32 %s43, 1
        %s260 = smul.addr %s259, 8
        %s261 = scalar_lea.vmem [#allocation2], %s260
        %p262 = pneg %p56
        %p263 = pneg %p53
        %s264 = sand.u32 %s23, 1
        %s265 = scalar_lea.sflag [#allocation6], %s264
        %s266 = sand.u32 %s69, 1
        %s267 = smul.addr %s266, 64
        %s268 = scalar_lea.vmem [#allocation5], %s267
        %p269 = pneg %p82
        %p270 = pneg %p79
        %s271 = sand.u32 %s23, 1
        %s272 = scalar_lea.sflag [#allocation6], %s271
        %s273 = sand.u32 %s97, 1
        %s274 = smul.addr %s273, 200
        %s275 = scalar_lea.vmem [#allocation7], %s274
        %p276 = pneg %p110
        %p277 = pneg %p107
        %p278 = pneg %p138
        %p279 = pneg %p135
        %s280 = sand.u32 %s125, 1
        %s281 = scalar_lea.sflag [#allocation4], %s280
        %s282 = sand.u32 %s125, 1
        %s283 = smul.addr %s282, 200
        %s284 = scalar_lea.vmem [#allocation8], %s283
        %s285 = smul.u32 25, %s28
        %s286 = smul.u32 25, %s28
        %v288 = vld [vmem:[%s234] sm:$0xf]
        %v289 = vld [vmem:[%s234 + $0x4] sm:$0xf]
        %v290 = vld [vmem:[%s243] sm:$0xf]
        %v291 = vld [vmem:[%s243 + $0x4] sm:$0xf]
        %v292 = vld [vmem:[%s243 + $0x8] sm:$0xf]
        %v293 = vld [vmem:[%s243 + $0xc] sm:$0xf]
        %v294 = vld [vmem:[%s243 + $0x10] sm:$0xf]
        %v295 = vld [vmem:[%s243 + $0x14] sm:$0xf]
        %v296 = vld [vmem:[%s243 + $0x18] sm:$0xf]
        %v297 = vld [vmem:[%s243 + $0x1c] sm:$0xf]
        %v298 = vld [vmem:[%s243 + $0x20] sm:$0xf]
        %v299 = vld [vmem:[%s243 + $0x24] sm:$0xf]
        %v300 = vld [vmem:[%s243 + $0x28] sm:$0xf]
        %v301 = vld [vmem:[%s243 + $0x2c] sm:$0xf]
        %v302 = vld [vmem:[%s243 + $0x30] sm:$0xf]
        %v303 = vld [vmem:[%s243 + $0x34] sm:$0xf]
        %v304 = vld [vmem:[%s243 + $0x38] sm:$0xf]
        %v305 = vld [vmem:[%s243 + $0x3c] sm:$0xf]
        loop: start=0, step=1, limit=25
        $region45: #{tpu_custom_call.1} parent=31 // loop_pre_header
          _
        $region46: #{tpu_custom_call.1} parent=31 // loop_header
          %s307 = sphi 0, %s311
          %p308 = scmp.ge.s32.totalorder %s307, 25
        $region47: #{tpu_custom_call.1} parent=31 // loop_header_branch
          %310 = sbr.rel (%p308) target = $region51
        $region48: #{tpu_custom_call.1} parent=31 // loop_body
          %s312 = smul.u32 %s307, 2
          %s313 = smul.addr %s312, 4
          %s314 = scalar_lea.vmem %s252, %s313 [#allocation7]
          %v315 = vld [vmem:[%s314] sm:$0xf]
          %v316 = vld [vmem:[%s314 + $0x4] sm:$0xf]
          %v319 = vunpack.c.l.b16 %v315
          %v320 = vunpack.c.l.b16 %v316
          %v321 = vpack.c.b16 %v320, %v319
          %v339 = vunpack.c.l.b16 %v290
          %v340 = vunpack.c.l.b16 %v291
          %v341 = vunpack.c.l.b16 %v292
          %v342 = vunpack.c.l.b16 %v293
          %v343 = vunpack.c.l.b16 %v294
          %v344 = vunpack.c.l.b16 %v295
          %v345 = vunpack.c.l.b16 %v296
          %v346 = vunpack.c.l.b16 %v297
          %v347 = vunpack.c.l.b16 %v298
          %v348 = vunpack.c.l.b16 %v299
          %v349 = vunpack.c.l.b16 %v300
          %v350 = vunpack.c.l.b16 %v301
          %v351 = vunpack.c.l.b16 %v302
          %v352 = vunpack.c.l.b16 %v303
          %v353 = vunpack.c.l.b16 %v304
          %v354 = vunpack.c.l.b16 %v305
          %v355 = vpack.c.b16 %v340, %v339
          %v356 = vpack.c.b16 %v342, %v341
          %v357 = vpack.c.b16 %v344, %v343
          %v358 = vpack.c.b16 %v346, %v345
          %v359 = vpack.c.b16 %v348, %v347
          %v360 = vpack.c.b16 %v350, %v349
          %v361 = vpack.c.b16 %v352, %v351
          %v362 = vpack.c.b16 %v354, %v353
          %371 = vmatprep.subr.bf16.mxu0 0
          %372 = vmatpush1.bf16.msra.mxu0 %v355
          %373 = vmatprep.subr.bf16.mxu0 0
          %374 = vmatpush1.bf16.msra.mxu0 %v356
          %375 = vmatprep.subr.bf16.mxu0 0
          %376 = vmatpush1.bf16.msra.mxu0 %v357
          %377 = vmatprep.subr.bf16.mxu0 0
          %378 = vmatpush1.bf16.msra.mxu0 %v358
          %379 = vmatprep.subr.bf16.mxu0 0
          %380 = vmatpush1.bf16.msra.mxu0 %v359
          %381 = vmatprep.subr.bf16.mxu0 0
          %382 = vmatpush1.bf16.msra.mxu0 %v360
          %383 = vmatprep.subr.bf16.mxu0 0
          %384 = vmatpush1.bf16.msra.mxu0 %v361
          %385 = vmatprep.subr.bf16.mxu0 0
          %386 = vmatpush1.bf16.msra.mxu0 %v362
          %387 = vmatprep.subr.bf16.mxu0 0
          %388 = vmatpush1.bf16.msra.mxu0 0
          %389 = vmatprep.subr.bf16.mxu0 0
          %390 = vmatpush1.bf16.msra.mxu0 0
          %391 = vmatprep.subr.bf16.mxu0 0
          %392 = vmatpush1.bf16.msra.mxu0 0
          %393 = vmatprep.subr.bf16.mxu0 0
          %394 = vmatpush1.bf16.msra.mxu0 0
          %395 = vmatprep.subr.bf16.mxu0 0
          %396 = vmatpush1.bf16.msra.mxu0 0
          %397 = vmatprep.subr.bf16.mxu0 0
          %398 = vmatpush1.bf16.msra.mxu0 0
          %399 = vmatprep.subr.bf16.mxu0 0
          %400 = vmatpush1.bf16.msra.mxu0 0
          %401 = vmatprep.subr.bf16.mxu0 0
          %402 = vmatpush1.bf16.msra.mxu0 0
          %403 = vmatprep.mubr.bf16.mxu0 0
          %404 = vmatmul.mubr.bf16.gmra.mrb[0].mxu0 %v321
          %v405 = vpop.f32.mrb[0].mxu0
          %v406 = vadd.f32 0.0, %v405
          %v407 = vpop.f32.mrb[0].mxu0
          %v408 = vpop.f32.mrb[0].mxu0
          %v409 = vadd.f32 0.0, %v408
          %v410 = vpop.f32.mrb[0].mxu0
          %411 = vdwg.mxu0
          %v412 = vpack.c.bf16 %v409, %v406
          %v415 = vunpack.c.l.b16 %v288
          %v416 = vunpack.c.l.b16 %v289
          %v417 = vpack.c.b16 %v416, %v415
          %vm418 = vcmask 130048
          %v420 = vsel %vm418, %v417, 0
          %422 = vmatprep.subr.bf16.mxu0 0
          %423 = vmatpush1.bf16.msra.mxu0 %v412
          %424 = vmatprep.subr.bf16.mxu0 0
          %425 = vmatpush1.bf16.msra.mxu0 0
          %426 = vmatprep.subr.bf16.mxu0 0
          %427 = vmatpush1.bf16.msra.mxu0 0
          %428 = vmatprep.subr.bf16.mxu0 0
          %429 = vmatpush1.bf16.msra.mxu0 0
          %430 = vmatprep.subr.bf16.mxu0 0
          %431 = vmatpush1.bf16.msra.mxu0 0
          %432 = vmatprep.subr.bf16.mxu0 0
          %433 = vmatpush1.bf16.msra.mxu0 0
          %434 = vmatprep.subr.bf16.mxu0 0
          %435 = vmatpush1.bf16.msra.mxu0 0
          %436 = vmatprep.subr.bf16.mxu0 0
          %437 = vmatpush1.bf16.msra.mxu0 0
          %438 = vmatprep.subr.bf16.mxu0 0
          %439 = vmatpush1.bf16.msra.mxu0 0
          %440 = vmatprep.subr.bf16.mxu0 0
          %441 = vmatpush1.bf16.msra.mxu0 0
          %442 = vmatprep.subr.bf16.mxu0 0
          %443 = vmatpush1.bf16.msra.mxu0 0
          %444 = vmatprep.subr.bf16.mxu0 0
          %445 = vmatpush1.bf16.msra.mxu0 0
          %446 = vmatprep.subr.bf16.mxu0 0
          %447 = vmatpush1.bf16.msra.mxu0 0
          %448 = vmatprep.subr.bf16.mxu0 0
          %449 = vmatpush1.bf16.msra.mxu0 0
          %450 = vmatprep.subr.bf16.mxu0 0
          %451 = vmatpush1.bf16.msra.mxu0 0
          %452 = vmatprep.subr.bf16.mxu0 0
          %453 = vmatpush1.bf16.msra.mxu0 0
          %454 = vmatprep.mubr.bf16.mxu0 0
          %455 = vmatmul.mubr.bf16.gmra.mrb[0].mxu0 %v420
          %v456 = vpop.f32.mrb[0].mxu0
          %v457 = vadd.f32 0.0, %v456
          %v458 = vpop.f32.mrb[0].mxu0
          %v459 = vpop.f32.mrb[0].mxu0
          %v460 = vadd.f32 0.0, %v459
          %v461 = vpop.f32.mrb[0].mxu0
          %462 = vdwg.mxu0
          %v463 = vpack.c.bf16 %v460, %v457
          %v465 = vunpack.c.l.b16 %v463
          %v466 = vunpack.c.h.b16 %v463
          %v467 = vpack.c.b16 %v465, %v465
          %v468 = vpack.c.b16 %v466, %v466
          %s471 = smul.addr %s312, 4
          %s472 = scalar_lea.vmem %s284, %s471 [#allocation8]
          %473 = vst [vmem:[%s472] sm:$0xf] %v467
          %474 = vst [vmem:[%s472 + $0x4] sm:$0xf] %v468
        $region49: #{tpu_custom_call.1} parent=31 // loop_footer
          %s311 = sadd.s32 1, %s307
        $region50: #{tpu_custom_call.1} parent=31 // loop_footer_branch
          %306 = sbr.rel target = $region46
        $region51: #{tpu_custom_call.1} parent=31 // loop_exit
          _
        %s475 = sand.u32 %s125, 1
        %s476 = scalar_lea.sflag [#allocation4], %s475
        %s477 = sand.u32 %s125, 1
        %s478 = smul.addr %s477, 200
        %s479 = scalar_lea.vmem [#allocation8], %s478
        // Predicated region
        $region52: #{tpu_custom_call.1} parent=31 // pred_check
          %p480 = pneg %p135
        $region53: #{tpu_custom_call.1} parent=31 // pred_check_branch
          %482 = sbr.rel (%p480) target = $region55
        $region54: #{tpu_custom_call.1} parent=31 // pred_region
          %s483 = smul.u32 25, %s28
          %s485 = ssub.s32 3200, 3200
          %486 = vsyncadd %s476, %s485
          %s487 = smul.addr %s483, 2
          %s488 = smul.addr %s27, 50
          %s489 = sadd.s32 %s487, %s488
          %s490 = smul.addr %s489, 64
          %s491 = scalar_lea.hbm %s3, %s490
          %s492 = sshll.u32 %s479, 4
          %s493 = int_to_ptr.vmem [resolvable:$true] %s492
          %498 = dma.vmem_to_hbm [thread:$0]  %s493, 3200, %s491, %s476, 64, 64, 4
        $region55: #{tpu_custom_call.1} parent=31 // pred_fallthru
          _
      $region32: #{tpu_custom_call.1} parent=5 // pred_fallthru
        _
      %p499 = scmp.le.s32.totalorder 2, %s18
      // Predicated region
      $region56: #{tpu_custom_call.1} parent=5 // pred_check
        %p500 = pneg %p499
      $region57: #{tpu_custom_call.1} parent=5 // pred_check_branch
        %502 = sbr.rel (%p500) target = $region59
      $region58: #{tpu_custom_call.1} parent=5 // pred_region
        %s503 = ssub.s32 %s18, 2
        // Predicated region
        $region60: #{tpu_custom_call.1} parent=58 // pred_check
          %p504 = pneg %p141
        $region61: #{tpu_custom_call.1} parent=58 // pred_check_branch
          %506 = sbr.rel (%p504) target = $region63
        $region62: #{tpu_custom_call.1} parent=58 // pred_region
          %s507 = sand.u32 %s126, 1
          %s508 = scalar_lea.sflag [#allocation4], %s507
          %s509 = sand.u32 %s126, 1
          %s510 = smul.addr %s509, 200
          %s511 = scalar_lea.vmem [#allocation8], %s510
          %512 = dma.done %s508, 3200
        $region63: #{tpu_custom_call.1} parent=58 // pred_fallthru
          _
      $region59: #{tpu_custom_call.1} parent=5 // pred_fallthru
        _
    $region6: #{tpu_custom_call.1} parent=1 // loop_footer
      %s22 = sadd.s32 1, %s18
    $region7: #{tpu_custom_call.1} parent=1 // loop_footer_branch
      %17 = sbr.rel target = $region3
    $region8: #{tpu_custom_call.1} parent=1 // loop_exit
      _
    %513 = vsyncpa [#allocation3], 1
    %s514 = scalar_lea.sflag [#allocation3], 1
    %515 = vsyncpa %s514, 1
    %516 = vsyncpa [#allocation6], 1
    %s517 = scalar_lea.sflag [#allocation6], 1
    %518 = vsyncpa %s517, 1
    %519 = vsyncpa [#allocation4], 1
    %s520 = scalar_lea.sflag [#allocation4], 1
    %521 = vsyncpa %s520, 1

</llo_original>
